<compile_context>
chip_gen: v6e
topology: v6e:2x2x1
jax: 0.10.0
libtpu: 0.0.40
codegen_flags: <defaults>
</compile_context>

<pallas_src>
import jax
import jax.numpy as jnp
from jax.experimental import pallas as pl
from jax.experimental.pallas import tpu as pltpu


def _round_up(x, m):
    return ((x + m - 1) // m) * m


def dqn_kernel(x_ref, w1_ref, b1_ref, w2_ref, b2_ref, w3_ref, b3_ref, o_ref):
    # fc1 + relu  (x, w1 are bf16; accumulate in f32)
    h1 = jnp.dot(x_ref[...], w1_ref[...], preferred_element_type=jnp.float32)
    h1 = jnp.maximum(h1 + b1_ref[...], 0.0)
    # fc2 + relu  (dominant 128x128 matmul in bf16)
    h2 = jnp.dot(h1.astype(jnp.bfloat16), w2_ref[...],
                 preferred_element_type=jnp.float32)
    h2 = jnp.maximum(h2 + b2_ref[...], 0.0)
    # fc3 (lane-dense padded N=128, no activation)
    out = jnp.dot(h2.astype(jnp.bfloat16), w3_ref[...],
                  preferred_element_type=jnp.float32)
    o_ref[...] = (out + b3_ref[...]).astype(o_ref.dtype)


def dqn_forward(x, params, tm=256):
    """x: (B, 4) f32. Returns (B, 3) f32."""
    w1, b1, w2, b2, w3, b3 = params
    B, K = x.shape
    H = w1.shape[1]          # 128
    OUT = w3.shape[1]        # 3
    K_PAD = 8                # pad fc1 contraction dim 4 -> 8
    N_PAD = 128              # lane-dense output width

    # Batch tile: >=256 for large batches (fills MXU on v6e/v7x); for small
    # batches use the batch itself rounded up to the bf16 sublane tile (16).
    TM = min(tm, _round_up(B, 16))
    Bp = _round_up(B, TM)

    # bf16 operands (biases stay f32), zero-padded where needed.
    x_p = jnp.zeros((Bp, K_PAD), jnp.bfloat16).at[:B, :K].set(
        x.astype(jnp.bfloat16))
    w1_p = jnp.zeros((K_PAD, H), jnp.bfloat16).at[:K, :].set(
        w1.astype(jnp.bfloat16))
    w2_b = w2.astype(jnp.bfloat16)
    w3_p = jnp.zeros((H, N_PAD), jnp.bfloat16).at[:, :OUT].set(
        w3.astype(jnp.bfloat16))
    b3_p = jnp.zeros((1, N_PAD), jnp.float32).at[:, :OUT].set(b3)

    grid = (Bp // TM,)
    const = lambda shape: pl.BlockSpec(shape, lambda i: (0, 0))

    out = pl.pallas_call(
        dqn_kernel,
        out_shape=jax.ShapeDtypeStruct((Bp, N_PAD), jnp.float32),
        grid=grid,
        in_specs=[
            pl.BlockSpec((TM, K_PAD), lambda i: (i, 0)),  # x tile, pipelined
            const((K_PAD, H)), const((1, H)),             # w1, b1 (resident)
            const((H, H)), const((1, H)),                 # w2, b2 (resident)
            const((H, N_PAD)), const((1, N_PAD)),         # w3, b3 (resident)
        ],
        out_specs=pl.BlockSpec((TM, N_PAD), lambda i: (i, 0)),
        compiler_params=pltpu.CompilerParams(
            dimension_semantics=("parallel",)),
    )(x_p, w1_p, b1, w2_b, b2, w3_p, b3_p)

    return out[:B, :OUT]


def init_params(key):
    """Deterministic init mimicking nn.Linear default (uniform +/- 1/sqrt(fan_in))."""
    dims = [(4, 128), (128, 128), (128, 3)]
    params = []
    for (fan_in, fan_out) in dims:
        key, kw, kb = jax.random.split(key, 3)
        bound = 1.0 / jnp.sqrt(fan_in)
        w = jax.random.uniform(kw, (fan_in, fan_out), jnp.float32, -bound, bound)
        b = jax.random.uniform(kb, (1, fan_out), jnp.float32, -bound, bound)
        params += [w, b]
    return tuple(params)


def reference_forward(x, params):
    w1, b1, w2, b2, w3, b3 = params
    h1 = jnp.maximum(x @ w1 + b1, 0.0)
    h2 = jnp.maximum(h1 @ w2 + b2, 0.0)
    return h2 @ w3 + b3


if __name__ == "__main__":
    key = jax.random.PRNGKey(0)
    key, kx = jax.random.split(key)

    batch = 8
    x = jax.random.normal(kx, (batch, 4), jnp.float32)
    params = init_params(key)

    out = dqn_forward(x, params)
    out = jax.block_until_ready(out)

    ref = reference_forward(x, params)  # f32 reference
    assert out.shape == (batch, 3), out.shape
    # Kernel uses bf16 operands with f32 accumulation -> loosened tolerance
    # vs. the pure-f32 reference.
    assert jnp.allclose(out, ref, atol=2e-2, rtol=2e-2), (
        "mismatch vs reference: max abs err = "
        f"{float(jnp.max(jnp.abs(out - ref)))}")

    print("KERNEL_OK")
</pallas_src>

<mosaic_0001>
module attributes {stable_mosaic.version = 11 : i64} {
  func.func @dqn_kernel(%arg0: i32, %arg1: memref<16x8xbf16, #tpu.memory_space<vmem>>, %arg2: memref<8x128xbf16, #tpu.memory_space<vmem>>, %arg3: memref<1x128xf32, #tpu.memory_space<vmem>>, %arg4: memref<128x128xbf16, #tpu.memory_space<vmem>>, %arg5: memref<1x128xf32, #tpu.memory_space<vmem>>, %arg6: memref<128x128xbf16, #tpu.memory_space<vmem>>, %arg7: memref<1x128xf32, #tpu.memory_space<vmem>>, %arg8: memref<16x128xf32, #tpu.memory_space<vmem>>) attributes {dimension_semantics = [#tpu.dimension_semantics<parallel>], iteration_bounds = array<i64: 1>, scalar_prefetch = 0 : i64, scratch_operands = 0 : i64, tpu.core_type = #tpu.core_type<tc>, window_params = [{transform_indices = @transform_0, window_bounds = array<i64: 16, 8>}, {pipeline_mode = #tpu.pipeline_mode<synchronous>, transform_indices = @transform_1, window_bounds = array<i64: 8, 128>}, {pipeline_mode = #tpu.pipeline_mode<synchronous>, transform_indices = @transform_2, window_bounds = array<i64: 1, 128>}, {pipeline_mode = #tpu.pipeline_mode<synchronous>, transform_indices = @transform_3, window_bounds = array<i64: 128, 128>}, {pipeline_mode = #tpu.pipeline_mode<synchronous>, transform_indices = @transform_4, window_bounds = array<i64: 1, 128>}, {pipeline_mode = #tpu.pipeline_mode<synchronous>, transform_indices = @transform_5, window_bounds = array<i64: 128, 128>}, {pipeline_mode = #tpu.pipeline_mode<synchronous>, transform_indices = @transform_6, window_bounds = array<i64: 1, 128>}, {transform_indices = @transform_7, window_bounds = array<i64: 16, 128>}]} {
    %c0 = arith.constant 0 : index
    %c0_0 = arith.constant 0 : index
    %0 = vector.load %arg1[%c0, %c0_0] : memref<16x8xbf16, #tpu.memory_space<vmem>>, vector<16x8xbf16>
    %c0_1 = arith.constant 0 : index
    %c0_2 = arith.constant 0 : index
    %1 = vector.load %arg2[%c0_1, %c0_2] : memref<8x128xbf16, #tpu.memory_space<vmem>>, vector<8x128xbf16>
    %cst = arith.constant dense<0.000000e+00> : vector<16x128xf32>
    %2 = tpu.matmul %0, %1, %cst {dimension_numbers = #tpu.dot_dimension_numbers<[1], [0], [0], [1], [0, 0, 1, 1], [], []>} : vector<16x8xbf16>, vector<8x128xbf16>, vector<16x128xf32> -> vector<16x128xf32>
    %c0_3 = arith.constant 0 : index
    %c0_4 = arith.constant 0 : index
    %3 = vector.load %arg3[%c0_3, %c0_4] : memref<1x128xf32, #tpu.memory_space<vmem>>, vector<1x128xf32>
    %4 = vector.broadcast %3 : vector<1x128xf32> to vector<16x128xf32>
    %5 = arith.addf %2, %4 : vector<16x128xf32>
    %cst_5 = arith.constant 0.000000e+00 : f32
    %6 = vector.broadcast %cst_5 : f32 to vector<16x128xf32>
    %7 = arith.maximumf %5, %6 : vector<16x128xf32>
    %8 = arith.truncf %7 : vector<16x128xf32> to vector<16x128xbf16>
    %c0_6 = arith.constant 0 : index
    %c0_7 = arith.constant 0 : index
    %9 = vector.load %arg4[%c0_6, %c0_7] : memref<128x128xbf16, #tpu.memory_space<vmem>>, vector<128x128xbf16>
    %cst_8 = arith.constant dense<0.000000e+00> : vector<16x128xf32>
    %10 = tpu.matmul %8, %9, %cst_8 {dimension_numbers = #tpu.dot_dimension_numbers<[1], [0], [0], [1], [0, 0, 1, 1], [], []>} : vector<16x128xbf16>, vector<128x128xbf16>, vector<16x128xf32> -> vector<16x128xf32>
    %c0_9 = arith.constant 0 : index
    %c0_10 = arith.constant 0 : index
    %11 = vector.load %arg5[%c0_9, %c0_10] : memref<1x128xf32, #tpu.memory_space<vmem>>, vector<1x128xf32>
    %12 = vector.broadcast %11 : vector<1x128xf32> to vector<16x128xf32>
    %13 = arith.addf %10, %12 : vector<16x128xf32>
    %cst_11 = arith.constant 0.000000e+00 : f32
    %14 = vector.broadcast %cst_11 : f32 to vector<16x128xf32>
    %15 = arith.maximumf %13, %14 : vector<16x128xf32>
    %16 = arith.truncf %15 : vector<16x128xf32> to vector<16x128xbf16>
    %c0_12 = arith.constant 0 : index
    %c0_13 = arith.constant 0 : index
    %17 = vector.load %arg6[%c0_12, %c0_13] : memref<128x128xbf16, #tpu.memory_space<vmem>>, vector<128x128xbf16>
    %cst_14 = arith.constant dense<0.000000e+00> : vector<16x128xf32>
    %18 = tpu.matmul %16, %17, %cst_14 {dimension_numbers = #tpu.dot_dimension_numbers<[1], [0], [0], [1], [0, 0, 1, 1], [], []>} : vector<16x128xbf16>, vector<128x128xbf16>, vector<16x128xf32> -> vector<16x128xf32>
    %c0_15 = arith.constant 0 : index
    %c0_16 = arith.constant 0 : index
    %19 = vector.load %arg7[%c0_15, %c0_16] : memref<1x128xf32, #tpu.memory_space<vmem>>, vector<1x128xf32>
    %20 = vector.broadcast %19 : vector<1x128xf32> to vector<16x128xf32>
    %21 = arith.addf %18, %20 : vector<16x128xf32>
    %c0_17 = arith.constant 0 : index
    %c0_18 = arith.constant 0 : index
    %22 = vector.load %arg8[%c0_17, %c0_18] : memref<16x128xf32, #tpu.memory_space<vmem>>, vector<16x128xf32>
    tpu.vector_store %arg8[%c0_17, %c0_18], %21 {strides = array<i32>} : memref<16x128xf32, #tpu.memory_space<vmem>>, vector<16x128xf32>,
    return
  }
  func.func @transform_0(%arg0: i32) -> (i32, i32) {
    %c0_i32 = arith.constant 0 : i32
    %c0_i32_0 = arith.constant 0 : i32
    return %arg0, %c0_i32 : i32, i32
  }
  func.func @transform_1(%arg0: i32) -> (i32, i32) {
    %c0_i32 = arith.constant 0 : i32
    %c0_i32_0 = arith.constant 0 : i32
    %c0_i32_1 = arith.constant 0 : i32
    return %c0_i32, %c0_i32_0 : i32, i32
  }
  func.func @transform_2(%arg0: i32) -> (i32, i32) {
    %c0_i32 = arith.constant 0 : i32
    %c0_i32_0 = arith.constant 0 : i32
    %c0_i32_1 = arith.constant 0 : i32
    return %c0_i32, %c0_i32_0 : i32, i32
  }
  func.func @transform_3(%arg0: i32) -> (i32, i32) {
    %c0_i32 = arith.constant 0 : i32
    %c0_i32_0 = arith.constant 0 : i32
    %c0_i32_1 = arith.constant 0 : i32
    return %c0_i32, %c0_i32_0 : i32, i32
  }
  func.func @transform_4(%arg0: i32) -> (i32, i32) {
    %c0_i32 = arith.constant 0 : i32
    %c0_i32_0 = arith.constant 0 : i32
    %c0_i32_1 = arith.constant 0 : i32
    return %c0_i32, %c0_i32_0 : i32, i32
  }
  func.func @transform_5(%arg0: i32) -> (i32, i32) {
    %c0_i32 = arith.constant 0 : i32
    %c0_i32_0 = arith.constant 0 : i32
    %c0_i32_1 = arith.constant 0 : i32
    return %c0_i32, %c0_i32_0 : i32, i32
  }
  func.func @transform_6(%arg0: i32) -> (i32, i32) {
    %c0_i32 = arith.constant 0 : i32
    %c0_i32_0 = arith.constant 0 : i32
    %c0_i32_1 = arith.constant 0 : i32
    return %c0_i32, %c0_i32_0 : i32, i32
  }
  func.func @transform_7(%arg0: i32) -> (i32, i32) {
    %c0_i32 = arith.constant 0 : i32
    %c0_i32_0 = arith.constant 0 : i32
    return %arg0, %c0_i32 : i32, i32
  }
}

</mosaic_0001>

<llo_original>
// kernel: tpu_custom_call.1
$region0: #{tpu_custom_call.1}
  #allocation0 [shape = 'u32[]', space=smem, size = 0x4, offset = 0x4, fixed_abs, tag = 'smem constant byte address 0x4 - core index']
  #allocation1 [shape = 'u32[144,128]{1,0:T(1,128)}', space=vmem, size = 0x12000, scoped, tag = 'internal scratch']
  %s0 = inlined_call_operand.vmem [shape: bf16[16,8], index: 0, kind: input, shape index: {}]
  %s1 = inlined_call_operand.vmem [shape: bf16[8,128], index: 1, kind: input, shape index: {}]
  %s2 = inlined_call_operand.vmem [shape: f32[1,128], index: 2, kind: input, shape index: {}]
  %s3 = inlined_call_operand.hbm [shape: bf16[128,128], index: 3, kind: input, shape index: {}]
  %s4 = inlined_call_operand.vmem [shape: f32[1,128], index: 4, kind: input, shape index: {}]
  %s5 = inlined_call_operand.hbm [shape: bf16[128,128], index: 5, kind: input, shape index: {}]
  %s6 = inlined_call_operand.vmem [shape: f32[1,128], index: 6, kind: input, shape index: {}]
  %s7 = inlined_call_operand.hbm [shape: f32[16,128], index: 7, kind: output, shape index: {}]
  %s8 = sld [smem:[#allocation0]]
  $region46: #{tpu_custom_call.1} parent=0
    _
  %s10 = ssub.s32 1, %s8
  %s11 = scalar_select 0, %s10, %s8
  $region1: #{tpu_custom_call.1} parent=0
    #allocation2 [shape = 'u8[32768]{0}', space=vmem, size = 0x8000, scoped, tag = 'input window, operand 3, single buffered']
    #allocation3 [shape = 's32[1]{0}', space=sflag, size = 0x4, scoped, tag = 'scoped memory for tpu_custom_call.1']
    #allocation4 [shape = 's32[1]{0}', space=sflag, size = 0x4, scoped, tag = 'scoped memory for tpu_custom_call.1']
    #allocation5 [shape = 'u8[32768]{0}', space=vmem, size = 0x8000, scoped, tag = 'input window, operand 5, single buffered']
    #allocation6 [shape = 's32[1]{0}', space=sflag, size = 0x4, scoped, tag = 'scoped memory for tpu_custom_call.1']
    #allocation7 [shape = 'u8[8192]{0}', space=vmem, size = 0x2000, scoped, tag = 'output window, operand 0, single buffered']
    %12 = vsyncpa [#allocation3], 0
    %13 = vsyncpa [#allocation6], 0
    %14 = vsyncpa [#allocation4], 0
    // Predicated region
    $region2: #{tpu_custom_call.1} parent=1 // pred_check
      _
    $region3: #{tpu_custom_call.1} parent=1 // pred_check_branch
      %16 = sbr.rel (0) target = $region5
    $region4: #{tpu_custom_call.1} parent=1 // pred_region
      _
    $region5: #{tpu_custom_call.1} parent=1 // pred_fallthru
      _
    // Predicated region
    $region6: #{tpu_custom_call.1} parent=1 // pred_check
      _
    $region7: #{tpu_custom_call.1} parent=1 // pred_check_branch
      %18 = sbr.rel (0) target = $region9
    $region8: #{tpu_custom_call.1} parent=1 // pred_region
      _
    $region9: #{tpu_custom_call.1} parent=1 // pred_fallthru
      _
    // Predicated region
    $region10: #{tpu_custom_call.1} parent=1 // pred_check
      _
    $region11: #{tpu_custom_call.1} parent=1 // pred_check_branch
      %20 = sbr.rel (0) target = $region13
    $region12: #{tpu_custom_call.1} parent=1 // pred_region
      _
    $region13: #{tpu_custom_call.1} parent=1 // pred_fallthru
      _
    // Predicated region
    $region14: #{tpu_custom_call.1} parent=1 // pred_check
      _
    $region15: #{tpu_custom_call.1} parent=1 // pred_check_branch
      %22 = sbr.rel (0) target = $region17
    $region16: #{tpu_custom_call.1} parent=1 // pred_region
      %s24 = ssub.s32 1024, 1024
      %25 = vsyncadd [#allocation3], %s24
      %s26 = sshll.u32 [#allocation2], 4
      %s27 = int_to_ptr.vmem [resolvable:$true] %s26
      %32 = dma.hbm_to_vmem [thread:$0]  %s3, 1024, %s27, [#allocation3], 64, 64, 4
    $region17: #{tpu_custom_call.1} parent=1 // pred_fallthru
      _
    // Predicated region
    $region18: #{tpu_custom_call.1} parent=1 // pred_check
      _
    $region19: #{tpu_custom_call.1} parent=1 // pred_check_branch
      %34 = sbr.rel (0) target = $region21
    $region20: #{tpu_custom_call.1} parent=1 // pred_region
      _
    $region21: #{tpu_custom_call.1} parent=1 // pred_fallthru
      _
    // Predicated region
    $region22: #{tpu_custom_call.1} parent=1 // pred_check
      _
    $region23: #{tpu_custom_call.1} parent=1 // pred_check_branch
      %36 = sbr.rel (0) target = $region25
    $region24: #{tpu_custom_call.1} parent=1 // pred_region
      %s38 = ssub.s32 1024, 1024
      %39 = vsyncadd [#allocation6], %s38
      %s40 = sshll.u32 [#allocation5], 4
      %s41 = int_to_ptr.vmem [resolvable:$true] %s40
      %46 = dma.hbm_to_vmem [thread:$0]  %s5, 1024, %s41, [#allocation6], 64, 64, 4
    $region25: #{tpu_custom_call.1} parent=1 // pred_fallthru
      _
    // Predicated region
    $region26: #{tpu_custom_call.1} parent=1 // pred_check
      _
    $region27: #{tpu_custom_call.1} parent=1 // pred_check_branch
      %48 = sbr.rel (0) target = $region29
    $region28: #{tpu_custom_call.1} parent=1 // pred_region
      _
    $region29: #{tpu_custom_call.1} parent=1 // pred_fallthru
      _
    // Predicated region
    $region30: #{tpu_custom_call.1} parent=1 // pred_check
      _
    $region31: #{tpu_custom_call.1} parent=1 // pred_check_branch
      %50 = sbr.rel (0) target = $region33
    $region32: #{tpu_custom_call.1} parent=1 // pred_region
      %51 = dma.done [#allocation3], 1024
    $region33: #{tpu_custom_call.1} parent=1 // pred_fallthru
      _
    // Predicated region
    $region34: #{tpu_custom_call.1} parent=1 // pred_check
      _
    $region35: #{tpu_custom_call.1} parent=1 // pred_check_branch
      %53 = sbr.rel (0) target = $region37
    $region36: #{tpu_custom_call.1} parent=1 // pred_region
      %54 = dma.done [#allocation6], 1024
    $region37: #{tpu_custom_call.1} parent=1 // pred_fallthru
      _
    %v56 = vld [vmem:[%s0] sm:$0xf]
    %v57 = vld [vmem:[%s0 + $0x4] sm:$0xf]
    %v58 = vld [vmem:[%s1] sm:$0xf]
    %v59 = vld [vmem:[%s2] sm:$0x1]
    %v61 = vlaneseq
    %v62 = vshrl.u32 %v61, 7
    %v63 = vsub.s32 0, %v62
    %v64 = vrot.slane %v59, %v63
    %v68 = vunpack.c.l.b16 %v56
    %v69 = vunpack.c.l.b16 %v57
    %v70 = vpack.c.b16 %v69, %v68
    %vm71 = vcmask 64512
    %v73 = vsel %vm71, %v70, 0
    %vm75 = vcmask 1043456
    %v77 = vsel %vm75, %v58, 0
    %79 = vmatprep.subr.bf16.mxu0 0
    %80 = vmatpush1.bf16.msra.mxu0 0
    %81 = vmatprep.subr.bf16.mxu0 0
    %82 = vmatpush1.bf16.msra.mxu0 0
    %83 = vmatprep.subr.bf16.mxu0 0
    %84 = vmatpush1.bf16.msra.mxu0 0
    %85 = vmatprep.subr.bf16.mxu0 0
    %86 = vmatpush1.bf16.msra.mxu0 0
    %87 = vmatprep.subr.bf16.mxu0 0
    %88 = vmatpush1.bf16.msra.mxu0 0
    %89 = vmatprep.subr.bf16.mxu0 0
    %90 = vmatpush1.bf16.msra.mxu0 0
    %91 = vmatprep.subr.bf16.mxu0 0
    %92 = vmatpush1.bf16.msra.mxu0 0
    %93 = vmatprep.subr.bf16.mxu0 0
    %94 = vmatpush1.bf16.msra.mxu0 %v77
    %95 = vmatprep.subr.bf16.mxu0 0
    %96 = vmatpush2.bf16.msra.mxu0 0
    %97 = vmatprep.subr.bf16.mxu0 0
    %98 = vmatpush2.bf16.msra.mxu0 0
    %99 = vmatprep.subr.bf16.mxu0 0
    %100 = vmatpush2.bf16.msra.mxu0 0
    %101 = vmatprep.subr.bf16.mxu0 0
    %102 = vmatpush2.bf16.msra.mxu0 0
    %103 = vmatprep.subr.bf16.mxu0 0
    %104 = vmatpush2.bf16.msra.mxu0 0
    %105 = vmatprep.subr.bf16.mxu0 0
    %106 = vmatpush2.bf16.msra.mxu0 0
    %107 = vmatprep.subr.bf16.mxu0 0
    %108 = vmatpush2.bf16.msra.mxu0 0
    %109 = vmatprep.subr.bf16.mxu0 0
    %110 = vmatpush2.bf16.msra.mxu0 0
    %111 = vmatprep.mubr.bf16.mxu0 0
    %112 = vmatmul.mubr.bf16.gmra.mxu0 %v73
    %v113 = vpop.f32.mrf.mxu0
    %v114 = vadd.f32 %v64, %v113
    %v115 = vpop.f32.mrf.mxu0
    %v116 = vpop.f32.mrf.mxu0
    %v117 = vadd.f32 %v64, %v116
    %v118 = vpop.f32.mrf.mxu0
    %119 = vdwg.mxu0
    %v120 = vmax.f32 %v114, 0.0
    %v121 = vmax.f32 %v117, 0.0
    %v122 = vpack.c.bf16 %v121, %v120
    %v123 = vld [vmem:[#allocation2] sm:$0xf]
    %v124 = vld [vmem:[#allocation2 + $0x4] sm:$0xf]
    %v125 = vld [vmem:[#allocation2 + $0x8] sm:$0xf]
    %v126 = vld [vmem:[#allocation2 + $0xc] sm:$0xf]
    %v127 = vld [vmem:[#allocation2 + $0x10] sm:$0xf]
    %v128 = vld [vmem:[#allocation2 + $0x14] sm:$0xf]
    %v129 = vld [vmem:[#allocation2 + $0x18] sm:$0xf]
    %v130 = vld [vmem:[#allocation2 + $0x1c] sm:$0xf]
    %v131 = vld [vmem:[#allocation2 + $0x20] sm:$0xf]
    %v132 = vld [vmem:[#allocation2 + $0x24] sm:$0xf]
    %v133 = vld [vmem:[#allocation2 + $0x28] sm:$0xf]
    %v134 = vld [vmem:[#allocation2 + $0x2c] sm:$0xf]
    %v135 = vld [vmem:[#allocation2 + $0x30] sm:$0xf]
    %v136 = vld [vmem:[#allocation2 + $0x34] sm:$0xf]
    %v137 = vld [vmem:[#allocation2 + $0x38] sm:$0xf]
    %v138 = vld [vmem:[#allocation2 + $0x3c] sm:$0xf]
    %v139 = vld [vmem:[%s4] sm:$0x1]
    %v141 = vlaneseq
    %v142 = vshrl.u32 %v141, 7
    %v143 = vsub.s32 0, %v142
    %v144 = vrot.slane %v139, %v143
    %v162 = vunpack.c.l.b16 %v123
    %v163 = vunpack.c.l.b16 %v124
    %v164 = vunpack.c.l.b16 %v125
    %v165 = vunpack.c.l.b16 %v126
    %v166 = vunpack.c.l.b16 %v127
    %v167 = vunpack.c.l.b16 %v128
    %v168 = vunpack.c.l.b16 %v129
    %v169 = vunpack.c.l.b16 %v130
    %v170 = vunpack.c.l.b16 %v131
    %v171 = vunpack.c.l.b16 %v132
    %v172 = vunpack.c.l.b16 %v133
    %v173 = vunpack.c.l.b16 %v134
    %v174 = vunpack.c.l.b16 %v135
    %v175 = vunpack.c.l.b16 %v136
    %v176 = vunpack.c.l.b16 %v137
    %v177 = vunpack.c.l.b16 %v138
    %v178 = vpack.c.b16 %v163, %v162
    %v179 = vpack.c.b16 %v165, %v164
    %v180 = vpack.c.b16 %v167, %v166
    %v181 = vpack.c.b16 %v169, %v168
    %v182 = vpack.c.b16 %v171, %v170
    %v183 = vpack.c.b16 %v173, %v172
    %v184 = vpack.c.b16 %v175, %v174
    %v185 = vpack.c.b16 %v177, %v176
    %194 = vmatprep.subr.bf16.mxu0 0
    %195 = vmatpush1.bf16.msra.mxu0 %v185
    %196 = vmatprep.subr.bf16.mxu0 0
    %197 = vmatpush1.bf16.msra.mxu0 %v184
    %198 = vmatprep.subr.bf16.mxu0 0
    %199 = vmatpush1.bf16.msra.mxu0 %v183
    %200 = vmatprep.subr.bf16.mxu0 0
    %201 = vmatpush1.bf16.msra.mxu0 %v182
    %202 = vmatprep.subr.bf16.mxu0 0
    %203 = vmatpush1.bf16.msra.mxu0 %v181
    %204 = vmatprep.subr.bf16.mxu0 0
    %205 = vmatpush1.bf16.msra.mxu0 %v180
    %206 = vmatprep.subr.bf16.mxu0 0
    %207 = vmatpush1.bf16.msra.mxu0 %v179
    %208 = vmatprep.subr.bf16.mxu0 0
    %209 = vmatpush1.bf16.msra.mxu0 %v178
    %210 = vmatprep.subr.bf16.mxu0 0
    %211 = vmatpush2.bf16.msra.mxu0 0
    %212 = vmatprep.subr.bf16.mxu0 0
    %213 = vmatpush2.bf16.msra.mxu0 0
    %214 = vmatprep.subr.bf16.mxu0 0
    %215 = vmatpush2.bf16.msra.mxu0 0
    %216 = vmatprep.subr.bf16.mxu0 0
    %217 = vmatpush2.bf16.msra.mxu0 0
    %218 = vmatprep.subr.bf16.mxu0 0
    %219 = vmatpush2.bf16.msra.mxu0 0
    %220 = vmatprep.subr.bf16.mxu0 0
    %221 = vmatpush2.bf16.msra.mxu0 0
    %222 = vmatprep.subr.bf16.mxu0 0
    %223 = vmatpush2.bf16.msra.mxu0 0
    %224 = vmatprep.subr.bf16.mxu0 0
    %225 = vmatpush2.bf16.msra.mxu0 0
    %226 = vmatprep.mubr.bf16.mxu0 0
    %227 = vmatmul.mubr.bf16.gmra.mxu0 %v122
    %v228 = vpop.f32.mrf.mxu0
    %v229 = vadd.f32 %v144, %v228
    %v230 = vpop.f32.mrf.mxu0
    %v231 = vpop.f32.mrf.mxu0
    %v232 = vadd.f32 %v144, %v231
    %v233 = vpop.f32.mrf.mxu0
    %234 = vdwg.mxu0
    %v235 = vmax.f32 %v229, 0.0
    %v236 = vmax.f32 %v232, 0.0
    %v237 = vpack.c.bf16 %v236, %v235
    %v238 = vld [vmem:[#allocation5] sm:$0xf]
    %v239 = vld [vmem:[#allocation5 + $0x4] sm:$0xf]
    %v240 = vld [vmem:[#allocation5 + $0x8] sm:$0xf]
    %v241 = vld [vmem:[#allocation5 + $0xc] sm:$0xf]
    %v242 = vld [vmem:[#allocation5 + $0x10] sm:$0xf]
    %v243 = vld [vmem:[#allocation5 + $0x14] sm:$0xf]
    %v244 = vld [vmem:[#allocation5 + $0x18] sm:$0xf]
    %v245 = vld [vmem:[#allocation5 + $0x1c] sm:$0xf]
    %v246 = vld [vmem:[#allocation5 + $0x20] sm:$0xf]
    %v247 = vld [vmem:[#allocation5 + $0x24] sm:$0xf]
    %v248 = vld [vmem:[#allocation5 + $0x28] sm:$0xf]
    %v249 = vld [vmem:[#allocation5 + $0x2c] sm:$0xf]
    %v250 = vld [vmem:[#allocation5 + $0x30] sm:$0xf]
    %v251 = vld [vmem:[#allocation5 + $0x34] sm:$0xf]
    %v252 = vld [vmem:[#allocation5 + $0x38] sm:$0xf]
    %v253 = vld [vmem:[#allocation5 + $0x3c] sm:$0xf]
    %v254 = vld [vmem:[%s6] sm:$0x1]
    %v256 = vlaneseq
    %v257 = vshrl.u32 %v256, 7
    %v258 = vsub.s32 0, %v257
    %v259 = vrot.slane %v254, %v258
    %v277 = vunpack.c.l.b16 %v238
    %v278 = vunpack.c.l.b16 %v239
    %v279 = vunpack.c.l.b16 %v240
    %v280 = vunpack.c.l.b16 %v241
    %v281 = vunpack.c.l.b16 %v242
    %v282 = vunpack.c.l.b16 %v243
    %v283 = vunpack.c.l.b16 %v244
    %v284 = vunpack.c.l.b16 %v245
    %v285 = vunpack.c.l.b16 %v246
    %v286 = vunpack.c.l.b16 %v247
    %v287 = vunpack.c.l.b16 %v248
    %v288 = vunpack.c.l.b16 %v249
    %v289 = vunpack.c.l.b16 %v250
    %v290 = vunpack.c.l.b16 %v251
    %v291 = vunpack.c.l.b16 %v252
    %v292 = vunpack.c.l.b16 %v253
    %v293 = vpack.c.b16 %v278, %v277
    %v294 = vpack.c.b16 %v280, %v279
    %v295 = vpack.c.b16 %v282, %v281
    %v296 = vpack.c.b16 %v284, %v283
    %v297 = vpack.c.b16 %v286, %v285
    %v298 = vpack.c.b16 %v288, %v287
    %v299 = vpack.c.b16 %v290, %v289
    %v300 = vpack.c.b16 %v292, %v291
    %309 = vmatprep.subr.bf16.mxu0 0
    %310 = vmatpush1.bf16.msra.mxu0 %v300
    %311 = vmatprep.subr.bf16.mxu0 0
    %312 = vmatpush1.bf16.msra.mxu0 %v299
    %313 = vmatprep.subr.bf16.mxu0 0
    %314 = vmatpush1.bf16.msra.mxu0 %v298
    %315 = vmatprep.subr.bf16.mxu0 0
    %316 = vmatpush1.bf16.msra.mxu0 %v297
    %317 = vmatprep.subr.bf16.mxu0 0
    %318 = vmatpush1.bf16.msra.mxu0 %v296
    %319 = vmatprep.subr.bf16.mxu0 0
    %320 = vmatpush1.bf16.msra.mxu0 %v295
    %321 = vmatprep.subr.bf16.mxu0 0
    %322 = vmatpush1.bf16.msra.mxu0 %v294
    %323 = vmatprep.subr.bf16.mxu0 0
    %324 = vmatpush1.bf16.msra.mxu0 %v293
    %325 = vmatprep.subr.bf16.mxu0 0
    %326 = vmatpush2.bf16.msra.mxu0 0
    %327 = vmatprep.subr.bf16.mxu0 0
    %328 = vmatpush2.bf16.msra.mxu0 0
    %329 = vmatprep.subr.bf16.mxu0 0
    %330 = vmatpush2.bf16.msra.mxu0 0
    %331 = vmatprep.subr.bf16.mxu0 0
    %332 = vmatpush2.bf16.msra.mxu0 0
    %333 = vmatprep.subr.bf16.mxu0 0
    %334 = vmatpush2.bf16.msra.mxu0 0
    %335 = vmatprep.subr.bf16.mxu0 0
    %336 = vmatpush2.bf16.msra.mxu0 0
    %337 = vmatprep.subr.bf16.mxu0 0
    %338 = vmatpush2.bf16.msra.mxu0 0
    %339 = vmatprep.subr.bf16.mxu0 0
    %340 = vmatpush2.bf16.msra.mxu0 0
    %341 = vmatprep.mubr.bf16.mxu0 0
    %342 = vmatmul.mubr.bf16.gmra.mxu0 %v237
    %v343 = vpop.f32.mrf.mxu0
    %v344 = vadd.f32 %v259, %v343
    %v345 = vpop.f32.mrf.mxu0
    %v346 = vpop.f32.mrf.mxu0
    %v347 = vadd.f32 %v259, %v346
    %v348 = vpop.f32.mrf.mxu0
    %349 = vdwg.mxu0
    %350 = vst [vmem:[#allocation7] sm:$0xff] %v344
    %351 = vst [vmem:[#allocation7 + $0x8] sm:$0xff] %v347
    // Predicated region
    $region38: #{tpu_custom_call.1} parent=1 // pred_check
      _
    $region39: #{tpu_custom_call.1} parent=1 // pred_check_branch
      %353 = sbr.rel (0) target = $region41
    $region40: #{tpu_custom_call.1} parent=1 // pred_region
      %s355 = ssub.s32 256, 256
      %356 = vsyncadd [#allocation4], %s355
      %s357 = sshll.u32 [#allocation7], 4
      %s358 = int_to_ptr.vmem [resolvable:$true] %s357
      %363 = dma.vmem_to_hbm [thread:$0]  %s358, 256, %s7, [#allocation4], 128, 128, 8
    $region41: #{tpu_custom_call.1} parent=1 // pred_fallthru
      _
    // Predicated region
    $region42: #{tpu_custom_call.1} parent=1 // pred_check
      _
    $region43: #{tpu_custom_call.1} parent=1 // pred_check_branch
      %365 = sbr.rel (0) target = $region45
    $region44: #{tpu_custom_call.1} parent=1 // pred_region
      %366 = dma.done [#allocation4], 256
    $region45: #{tpu_custom_call.1} parent=1 // pred_fallthru
      _
    %367 = vsyncpa [#allocation3], 1
    %368 = vsyncpa [#allocation6], 1
    %369 = vsyncpa [#allocation4], 1

</llo_original>
